<compile_context>
chip_gen: v5e
topology: v5e:2x2
jax: 0.10.0
libtpu: 0.0.40
codegen_flags: <defaults>
</compile_context>

<pallas_src>
import functools

import jax
import jax.numpy as jnp
from jax.experimental import pallas as pl
from jax.experimental.pallas import tpu as pltpu


# ----------------------------- Pallas kernel ------------------------------- #

def _make_resblock_kernel(dilations, relu_slope, kernel_size, t_total, t_tile,
                          halo_l, halo_r):
    """All arguments are static Python values."""
    K = kernel_size
    # Per-conv asymmetric 'same' pads (PyTorch: left = total_pad // 2).
    pads = tuple(
        tuple((d * (K - 1) // 2, d * (K - 1) - d * (K - 1) // 2) for d in g)
        for g in dilations)
    w0 = t_tile + halo_l + halo_r

    if 0.0 <= relu_slope <= 1.0:
        def leaky(v):                       # 2 VPU ops instead of 3
            return jnp.maximum(v, relu_slope * v)
    else:
        def leaky(v):
            return jnp.where(v > 0, v, relu_slope * v)

    def kernel(xc_ref, halo_ref, w_ref, b_ref, o_ref):
        t = pl.program_id(1)

        # Assemble (C, W0) working window: [left halo | center tile | right halo]
        xc = xc_ref[0]                       # (C, T_TILE) f32
        strips = halo_ref[0, 0]              # (C, halo_l + halo_r) f32
        h = jnp.concatenate([strips[:, :halo_l], xc, strips[:, halo_l:]],
                            axis=1)          # (C, W0)

        # Validity mask over global positions (zero outside [0, T)) so every
        # stacked conv sees the same zero 'same'-padding as the reference.
        pos = (t * t_tile - halo_l) + jax.lax.broadcasted_iota(
            jnp.int32, (1, w0), 1)
        mask = jnp.logical_and(pos >= 0, pos < t_total).astype(jnp.float32)

        conv_idx = 0
        cum_h, w_h = 0, w0                   # offset/width of h within W0
        for group, gpads in zip(dilations, pads):
            y, cum_y, w_y = h, cum_h, w_h
            for d, (lp, rp) in zip(group, gpads):
                y = leaky(y)
                if conv_idx > 0:             # first conv's halo is already zero
                    y = y * mask[:, cum_y:cum_y + w_y]
                yb = y.astype(jnp.bfloat16)
                w_out = w_y - lp - rp
                # Stack the K dilated taps along the contraction dim and do a
                # single (C, K*C) @ (K*C, w_out) MXU matmul (f32 accumulation).
                stacked = jnp.concatenate(
                    [yb[:, k * d:k * d + w_out] for k in range(K)], axis=0)
                y = jnp.dot(w_ref[conv_idx], stacked,
                            preferred_element_type=jnp.float32)
                y = y + b_ref[conv_idx]      # (C, 1) broadcast over lanes
                conv_idx += 1
                cum_y += lp
                w_y = w_out
            # Residual add: crop h to this group's output window.
            crop = cum_y - cum_h
            h = h[:, crop:crop + w_y] + y
            cum_h, w_h = cum_y, w_y

        # Central T_TILE lanes of the surviving window are this tile's output.
        start = halo_l - cum_h
        o_ref[0] = h[:, start:start + t_tile].astype(o_ref.dtype)

    return kernel


# -------------------------------- wrapper ----------------------------------- #

def resblock_pallas(x, w_hat, bias, *, dilations, relu_slope, kernel_size,
                    t_tile=512):
    """x: (B, C, T) f32.  w_hat: (N, C_out, C_in, K) weight-normed conv weights.
    bias: (N, C).  Returns (B, C, T)."""
    B, C, T = x.shape
    K = int(kernel_size)
    n_convs = sum(len(g) for g in dilations)
    assert w_hat.shape == (n_convs, C, C, K) and bias.shape == (n_convs, C)

    # Cumulative left/right halo over ALL stacked convs (groups run in series).
    all_d = [d for g in dilations for d in g]
    lefts = [(d * (K - 1)) // 2 for d in all_d]
    rights = [d * (K - 1) - l for d, l in zip(all_d, lefts)]
    halo_l = max(sum(lefts), 1)
    halo_r = max(sum(rights), 1)

    # Lane-dense T tile: multiple of 128, no larger than needed.
    t_tile = max(128, ((min(int(t_tile), T) + 127) // 128) * 128)
    n_t = int(pl.cdiv(T, t_tile))
    t_round = n_t * t_tile
    w0 = t_tile + halo_l + halo_r

    # Fused conv weights (C_out, K*C_in) in bf16 for the MXU; bias (N, C, 1).
    w_fused = (jnp.transpose(w_hat, (0, 1, 3, 2))
               .reshape(n_convs, C, K * C).astype(jnp.bfloat16))
    b_stacked = bias.reshape(n_convs, C, 1).astype(jnp.float32)

    # Center tiles (right-padded to a tile multiple) + per-tile halo strips.
    xc = jnp.pad(x.astype(jnp.float32), ((0, 0), (0, 0), (0, t_round - T)))
    xh = jnp.pad(xc, ((0, 0), (0, 0), (halo_l, halo_r)))
    left_strips = jnp.stack(
        [xh[:, :, t * t_tile:t * t_tile + halo_l] for t in range(n_t)], axis=1)
    right_strips = jnp.stack(
        [xh[:, :, t * t_tile + halo_l + t_tile:
                  t * t_tile + halo_l + t_tile + halo_r]
         for t in range(n_t)], axis=1)
    halos = jnp.concatenate([left_strips, right_strips], axis=-1)  # (B,nT,C,hl+hr)

    kernel = _make_resblock_kernel(
        tuple(tuple(g) for g in dilations), float(relu_slope), K,
        int(T), int(t_tile), int(halo_l), int(halo_r))

    # VMEM budget (double-buffered blocks + working arrays) and cost hint.
    blk_bytes = 2 * (C * t_tile * 4 + C * (halo_l + halo_r) * 4
                     + C * t_tile * 4 + n_convs * C * K * C * 2
                     + n_convs * C * 4)
    work_bytes = 5 * C * w0 * 4 + 2 * K * C * w0 * 2
    vmem_limit = int(min(max(2 * (blk_bytes + work_bytes), 32 * 2 ** 20),
                         64 * 2 ** 20))
    flops = 2 * n_convs * K * C * C * t_round * B
    bytes_accessed = int(xc.size * 4 + B * C * t_round * 4 + halos.size * 4
                         + w_fused.size * 2 + b_stacked.size * 4)

    out = pl.pallas_call(
        kernel,
        out_shape=jax.ShapeDtypeStruct((B, C, t_round), jnp.float32),
        grid=(B, n_t),
        in_specs=[
            pl.BlockSpec((1, C, t_tile), lambda b, t: (b, 0, t)),
            pl.BlockSpec((1, 1, C, halo_l + halo_r), lambda b, t: (b, t, 0, 0)),
            pl.BlockSpec((n_convs, C, K * C), lambda b, t: (0, 0, 0)),
            pl.BlockSpec((n_convs, C, 1), lambda b, t: (0, 0, 0)),
        ],
        out_specs=pl.BlockSpec((1, C, t_tile), lambda b, t: (b, 0, t)),
        compiler_params=pltpu.CompilerParams(
            dimension_semantics=("parallel", "parallel"),
            vmem_limit_bytes=vmem_limit),
        cost_estimate=pl.CostEstimate(flops=flops, transcendentals=0,
                                      bytes_accessed=bytes_accessed),
    )(xc, halos, w_fused, b_stacked)

    return out[:, :, :T].astype(x.dtype)


# ------------------------- parameter construction -------------------------- #

def make_resblock_params(key, channels, kernel_size, dilations):
    """Deterministic synthetic params.  weight_norm: w = g * v / ||v|| with the
    norm taken over (C_in, K) per output channel (PyTorch dim=0 default)."""
    n_convs = sum(len(g) for g in dilations)
    kv, kg, kb = jax.random.split(key, 3)
    fan_in = channels * kernel_size
    v = jax.random.normal(kv, (n_convs, channels, channels, kernel_size),
                          jnp.float32) * (1.0 / jnp.sqrt(fan_in))
    g = 1.0 + 0.1 * jax.random.normal(kg, (n_convs, channels), jnp.float32)
    b = 0.1 * jax.random.normal(kb, (n_convs, channels), jnp.float32)
    norm = jnp.sqrt(jnp.sum(v * v, axis=(2, 3), keepdims=True))      # (N,C,1,1)
    w_hat = g[:, :, None, None] * v / norm                           # (N,C,C,K)
    return w_hat, b


# ----------------------------- pure-JAX reference --------------------------- #

def resblock_ref(x, w_hat, bias, *, dilations, relu_slope, kernel_size):
    idx = 0
    for group in dilations:
        y = x
        for d in group:
            y = jnp.where(y > 0, y, relu_slope * y)
            total_pad = d * (kernel_size - 1)
            left = total_pad // 2
            right = total_pad - left
            y = jax.lax.conv_general_dilated(
                y, w_hat[idx], window_strides=(1,), padding=[(left, right)],
                rhs_dilation=(d,), dimension_numbers=("NCH", "OIH", "NCH"))
            y = y + bias[idx][None, :, None]
            idx += 1
        x = x + y
    return x


# ----------------------------------- main ----------------------------------- #

if __name__ == "__main__":
    # Small shapes consistent with ResBlock(channels, relu_slope, K, dilations)
    B, C, T = 2, 8, 64
    kernel_size = 3
    dilations = ((1, 3), (5,))
    relu_slope = 0.1

    key = jax.random.PRNGKey(0)
    kx, kp = jax.random.split(key)
    x = jax.random.normal(kx, (B, C, T), jnp.float32)
    w_hat, bias = make_resblock_params(kp, C, kernel_size, dilations)

    fwd = functools.partial(resblock_pallas, dilations=dilations,
                            relu_slope=relu_slope, kernel_size=kernel_size,
                            t_tile=512)
    out = jax.block_until_ready(jax.jit(fwd)(x, w_hat, bias))

    ref = resblock_ref(x, w_hat, bias, dilations=dilations,
                       relu_slope=relu_slope, kernel_size=kernel_size)
    assert out.shape == (B, C, T)
    # bf16 MXU operands (f32 accumulation) -> loosened tolerance vs f32 reference.
    max_err = float(jnp.max(jnp.abs(out - ref)))
    assert jnp.allclose(out, ref, atol=5e-2, rtol=5e-2), (
        f"mismatch vs reference, max abs err {max_err}")
    print("KERNEL_OK")
</pallas_src>

<mosaic_0001>
module attributes {stable_mosaic.version = 11 : i64} {
  func.func @kernel(%arg0: i32, %arg1: i32, %arg2: memref<1x8x128xf32, #tpu.memory_space<vmem>>, %arg3: memref<1x1x8x18xf32, #tpu.memory_space<vmem>>, %arg4: memref<3x8x24xbf16, #tpu.memory_space<vmem>>, %arg5: memref<3x8x1xf32, #tpu.memory_space<vmem>>, %arg6: memref<1x8x128xf32, #tpu.memory_space<vmem>>) attributes {dimension_semantics = [#tpu.dimension_semantics<parallel>, #tpu.dimension_semantics<parallel>], iteration_bounds = array<i64: 2, 1>, scalar_prefetch = 0 : i64, scratch_operands = 0 : i64, tpu.core_type = #tpu.core_type<tc>, window_params = [{transform_indices = @transform_0, window_bounds = array<i64: 1, 8, 128>}, {transform_indices = @transform_1, window_bounds = array<i64: 1, 1, 8, 18>}, {pipeline_mode = #tpu.pipeline_mode<synchronous>, transform_indices = @transform_2, window_bounds = array<i64: 3, 8, 24>}, {pipeline_mode = #tpu.pipeline_mode<synchronous>, transform_indices = @transform_3, window_bounds = array<i64: 3, 8, 1>}, {transform_indices = @transform_4, window_bounds = array<i64: 1, 8, 128>}]} {
    %c0 = arith.constant 0 : index
    %c0_0 = arith.constant 0 : index
    %c0_1 = arith.constant 0 : index
    %0 = vector.load %arg2[%c0, %c0_0, %c0_1] : memref<1x8x128xf32, #tpu.memory_space<vmem>>, vector<1x8x128xf32>
    %1 = vector.shape_cast %0 : vector<1x8x128xf32> to vector<8x128xf32>
    %c0_2 = arith.constant 0 : index
    %c0_3 = arith.constant 0 : index
    %c0_4 = arith.constant 0 : index
    %c0_5 = arith.constant 0 : index
    %2 = vector.load %arg3[%c0_2, %c0_3, %c0_4, %c0_5] : memref<1x1x8x18xf32, #tpu.memory_space<vmem>>, vector<1x1x8x18xf32>
    %3 = vector.shape_cast %2 : vector<1x1x8x18xf32> to vector<8x18xf32>
    %4 = vector.extract_strided_slice %3 {offsets = [0, 0], sizes = [8, 9], strides = [1, 1]} : vector<8x18xf32> to vector<8x9xf32>
    %5 = vector.extract_strided_slice %3 {offsets = [0, 9], sizes = [8, 9], strides = [1, 1]} : vector<8x18xf32> to vector<8x9xf32>
    %6 = tpu.concatenate %4, %1, %5 in 1 : vector<8x9xf32>, vector<8x128xf32>, vector<8x9xf32> -> vector<8x146xf32>
    %c128_i32 = arith.constant 128 : i32
    %7 = arith.muli %arg1, %c128_i32 : i32
    %c9_i32 = arith.constant 9 : i32
    %8 = arith.subi %7, %c9_i32 : i32
    %9 = tpu.iota {dimensions = array<i32: 1>} : vector<1x146xi32>
    %10 = vector.broadcast %8 : i32 to vector<1x146xi32>
    %11 = arith.addi %10, %9 : vector<1x146xi32>
    %c0_i32 = arith.constant 0 : i32
    %12 = vector.broadcast %c0_i32 : i32 to vector<1x146xi32>
    %13 = arith.cmpi sge, %11, %12 : vector<1x146xi32>
    %c64_i32 = arith.constant 64 : i32
    %14 = vector.broadcast %c64_i32 : i32 to vector<1x146xi32>
    %15 = arith.cmpi slt, %11, %14 : vector<1x146xi32>
    %16 = arith.andi %13, %15 : vector<1x146xi1>
    %17 = arith.extui %16 : vector<1x146xi1> to vector<1x146xi32>
    %18 = arith.sitofp %17 : vector<1x146xi32> to vector<1x146xf32>
    %cst = arith.constant 1.000000e-01 : f32
    %19 = vector.broadcast %cst : f32 to vector<8x146xf32>
    %20 = arith.mulf %19, %6 : vector<8x146xf32>
    %21 = arith.maximumf %6, %20 : vector<8x146xf32>
    %22 = arith.truncf %21 : vector<8x146xf32> to vector<8x146xbf16>
    %23 = vector.extract_strided_slice %22 {offsets = [0, 0], sizes = [8, 144], strides = [1, 1]} : vector<8x146xbf16> to vector<8x144xbf16>
    %24 = vector.extract_strided_slice %22 {offsets = [0, 1], sizes = [8, 144], strides = [1, 1]} : vector<8x146xbf16> to vector<8x144xbf16>
    %25 = vector.extract_strided_slice %22 {offsets = [0, 2], sizes = [8, 144], strides = [1, 1]} : vector<8x146xbf16> to vector<8x144xbf16>
    %26 = tpu.concatenate %23, %24, %25 in 0 : vector<8x144xbf16>, vector<8x144xbf16>, vector<8x144xbf16> -> vector<24x144xbf16>
    %c0_6 = arith.constant 0 : index
    %c0_7 = arith.constant 0 : index
    %c0_8 = arith.constant 0 : index
    %27 = vector.load %arg4[%c0_6, %c0_7, %c0_8] : memref<3x8x24xbf16, #tpu.memory_space<vmem>>, vector<1x8x24xbf16>
    %28 = vector.shape_cast %27 : vector<1x8x24xbf16> to vector<8x24xbf16>
    %cst_9 = arith.constant dense<0.000000e+00> : vector<8x144xf32>
    %29 = tpu.matmul %28, %26, %cst_9 {dimension_numbers = #tpu.dot_dimension_numbers<[1], [0], [0], [1], [0, 0, 1, 1], [], []>} : vector<8x24xbf16>, vector<24x144xbf16>, vector<8x144xf32> -> vector<8x144xf32>
    %c0_10 = arith.constant 0 : index
    %c0_11 = arith.constant 0 : index
    %c0_12 = arith.constant 0 : index
    %30 = vector.load %arg5[%c0_10, %c0_11, %c0_12] : memref<3x8x1xf32, #tpu.memory_space<vmem>>, vector<1x8x1xf32>
    %31 = vector.shape_cast %30 : vector<1x8x1xf32> to vector<8x1xf32>
    %32 = vector.broadcast %31 : vector<8x1xf32> to vector<8x144xf32>
    %33 = arith.addf %29, %32 : vector<8x144xf32>
    %cst_13 = arith.constant 1.000000e-01 : f32
    %34 = vector.broadcast %cst_13 : f32 to vector<8x144xf32>
    %35 = arith.mulf %34, %33 : vector<8x144xf32>
    %36 = arith.maximumf %33, %35 : vector<8x144xf32>
    %37 = vector.extract_strided_slice %18 {offsets = [0, 1], sizes = [1, 144], strides = [1, 1]} : vector<1x146xf32> to vector<1x144xf32>
    %38 = vector.broadcast %37 : vector<1x144xf32> to vector<8x144xf32>
    %39 = arith.mulf %36, %38 : vector<8x144xf32>
    %40 = arith.truncf %39 : vector<8x144xf32> to vector<8x144xbf16>
    %41 = vector.extract_strided_slice %40 {offsets = [0, 0], sizes = [8, 138], strides = [1, 1]} : vector<8x144xbf16> to vector<8x138xbf16>
    %42 = vector.extract_strided_slice %40 {offsets = [0, 3], sizes = [8, 138], strides = [1, 1]} : vector<8x144xbf16> to vector<8x138xbf16>
    %43 = vector.extract_strided_slice %40 {offsets = [0, 6], sizes = [8, 138], strides = [1, 1]} : vector<8x144xbf16> to vector<8x138xbf16>
    %44 = tpu.concatenate %41, %42, %43 in 0 : vector<8x138xbf16>, vector<8x138xbf16>, vector<8x138xbf16> -> vector<24x138xbf16>
    %c1 = arith.constant 1 : index
    %c0_14 = arith.constant 0 : index
    %c0_15 = arith.constant 0 : index
    %45 = vector.load %arg4[%c1, %c0_14, %c0_15] : memref<3x8x24xbf16, #tpu.memory_space<vmem>>, vector<1x8x24xbf16>
    %46 = vector.shape_cast %45 : vector<1x8x24xbf16> to vector<8x24xbf16>
    %cst_16 = arith.constant dense<0.000000e+00> : vector<8x138xf32>
    %47 = tpu.matmul %46, %44, %cst_16 {dimension_numbers = #tpu.dot_dimension_numbers<[1], [0], [0], [1], [0, 0, 1, 1], [], []>} : vector<8x24xbf16>, vector<24x138xbf16>, vector<8x138xf32> -> vector<8x138xf32>
    %c1_17 = arith.constant 1 : index
    %c0_18 = arith.constant 0 : index
    %c0_19 = arith.constant 0 : index
    %48 = vector.load %arg5[%c1_17, %c0_18, %c0_19] : memref<3x8x1xf32, #tpu.memory_space<vmem>>, vector<1x8x1xf32>
    %49 = vector.shape_cast %48 : vector<1x8x1xf32> to vector<8x1xf32>
    %50 = vector.broadcast %49 : vector<8x1xf32> to vector<8x138xf32>
    %51 = arith.addf %47, %50 : vector<8x138xf32>
    %52 = vector.extract_strided_slice %6 {offsets = [0, 4], sizes = [8, 138], strides = [1, 1]} : vector<8x146xf32> to vector<8x138xf32>
    %53 = arith.addf %52, %51 : vector<8x138xf32>
    %cst_20 = arith.constant 1.000000e-01 : f32
    %54 = vector.broadcast %cst_20 : f32 to vector<8x138xf32>
    %55 = arith.mulf %54, %53 : vector<8x138xf32>
    %56 = arith.maximumf %53, %55 : vector<8x138xf32>
    %57 = vector.extract_strided_slice %18 {offsets = [0, 4], sizes = [1, 138], strides = [1, 1]} : vector<1x146xf32> to vector<1x138xf32>
    %58 = vector.broadcast %57 : vector<1x138xf32> to vector<8x138xf32>
    %59 = arith.mulf %56, %58 : vector<8x138xf32>
    %60 = arith.truncf %59 : vector<8x138xf32> to vector<8x138xbf16>
    %61 = vector.extract_strided_slice %60 {offsets = [0, 0], sizes = [8, 128], strides = [1, 1]} : vector<8x138xbf16> to vector<8x128xbf16>
    %62 = vector.extract_strided_slice %60 {offsets = [0, 5], sizes = [8, 128], strides = [1, 1]} : vector<8x138xbf16> to vector<8x128xbf16>
    %63 = vector.extract_strided_slice %60 {offsets = [0, 10], sizes = [8, 128], strides = [1, 1]} : vector<8x138xbf16> to vector<8x128xbf16>
    %64 = tpu.concatenate %61, %62, %63 in 0 : vector<8x128xbf16>, vector<8x128xbf16>, vector<8x128xbf16> -> vector<24x128xbf16>
    %c2 = arith.constant 2 : index
    %c0_21 = arith.constant 0 : index
    %c0_22 = arith.constant 0 : index
    %65 = vector.load %arg4[%c2, %c0_21, %c0_22] : memref<3x8x24xbf16, #tpu.memory_space<vmem>>, vector<1x8x24xbf16>
    %66 = vector.shape_cast %65 : vector<1x8x24xbf16> to vector<8x24xbf16>
    %cst_23 = arith.constant dense<0.000000e+00> : vector<8x128xf32>
    %67 = tpu.matmul %66, %64, %cst_23 {dimension_numbers = #tpu.dot_dimension_numbers<[1], [0], [0], [1], [0, 0, 1, 1], [], []>} : vector<8x24xbf16>, vector<24x128xbf16>, vector<8x128xf32> -> vector<8x128xf32>
    %c2_24 = arith.constant 2 : index
    %c0_25 = arith.constant 0 : index
    %c0_26 = arith.constant 0 : index
    %68 = vector.load %arg5[%c2_24, %c0_25, %c0_26] : memref<3x8x1xf32, #tpu.memory_space<vmem>>, vector<1x8x1xf32>
    %69 = vector.shape_cast %68 : vector<1x8x1xf32> to vector<8x1xf32>
    %70 = vector.broadcast %69 : vector<8x1xf32> to vector<8x128xf32>
    %71 = arith.addf %67, %70 : vector<8x128xf32>
    %72 = vector.extract_strided_slice %53 {offsets = [0, 5], sizes = [8, 128], strides = [1, 1]} : vector<8x138xf32> to vector<8x128xf32>
    %73 = arith.addf %72, %71 : vector<8x128xf32>
    %c0_27 = arith.constant 0 : index
    %c0_28 = arith.constant 0 : index
    %c0_29 = arith.constant 0 : index
    %74 = vector.load %arg6[%c0_27, %c0_28, %c0_29] : memref<1x8x128xf32, #tpu.memory_space<vmem>>, vector<1x8x128xf32>
    %75 = vector.shape_cast %74 : vector<1x8x128xf32> to vector<8x128xf32>
    %76 = vector.shape_cast %73 : vector<8x128xf32> to vector<1x8x128xf32>
    tpu.vector_store %arg6[%c0_27, %c0_28, %c0_29], %76 {strides = array<i32>} : memref<1x8x128xf32, #tpu.memory_space<vmem>>, vector<1x8x128xf32>,
    return
  }
  func.func @transform_0(%arg0: i32, %arg1: i32) -> (i32, i32, i32) {
    %c0_i32 = arith.constant 0 : i32
    %c0_i32_0 = arith.constant 0 : i32
    return %arg0, %c0_i32, %arg1 : i32, i32, i32
  }
  func.func @transform_1(%arg0: i32, %arg1: i32) -> (i32, i32, i32, i32) {
    %c0_i32 = arith.constant 0 : i32
    %c0_i32_0 = arith.constant 0 : i32
    %c0_i32_1 = arith.constant 0 : i32
    return %arg0, %arg1, %c0_i32, %c0_i32_0 : i32, i32, i32, i32
  }
  func.func @transform_2(%arg0: i32, %arg1: i32) -> (i32, i32, i32) {
    %c0_i32 = arith.constant 0 : i32
    %c0_i32_0 = arith.constant 0 : i32
    %c0_i32_1 = arith.constant 0 : i32
    %c0_i32_2 = arith.constant 0 : i32
    return %c0_i32, %c0_i32_0, %c0_i32_1 : i32, i32, i32
  }
  func.func @transform_3(%arg0: i32, %arg1: i32) -> (i32, i32, i32) {
    %c0_i32 = arith.constant 0 : i32
    %c0_i32_0 = arith.constant 0 : i32
    %c0_i32_1 = arith.constant 0 : i32
    %c0_i32_2 = arith.constant 0 : i32
    return %c0_i32, %c0_i32_0, %c0_i32_1 : i32, i32, i32
  }
  func.func @transform_4(%arg0: i32, %arg1: i32) -> (i32, i32, i32) {
    %c0_i32 = arith.constant 0 : i32
    %c0_i32_0 = arith.constant 0 : i32
    return %arg0, %c0_i32, %arg1 : i32, i32, i32
  }
}

</mosaic_0001>

<llo_original>
// kernel: resblock_pallas.1
$region0: #{resblock_pallas.1}
  #allocation0 [shape = 'u32[]', space=smem, size = 0x4, offset = 0x4, fixed_abs, tag = 'smem constant byte address 0x4 - core index']
  #allocation1 [shape = 'u32[72,128]{1,0:T(1,128)}', space=vmem, size = 0x9000, scoped, tag = 'internal scratch']
  %s0 = inlined_call_operand.vmem [shape: f32[2,8,128], index: 0, kind: input, shape index: {}]
  %s1 = inlined_call_operand.vmem [shape: f32[2,1,8,18], index: 1, kind: input, shape index: {}]
  %s2 = inlined_call_operand.vmem [shape: bf16[3,8,24], index: 2, kind: input, shape index: {}]
  %s3 = inlined_call_operand.vmem [shape: f32[3,8,1], index: 3, kind: input, shape index: {}]
  %s4 = inlined_call_operand.hbm [shape: f32[2,8,128], index: 4, kind: output, shape index: {}]
  %s5 = sld [smem:[#allocation0]]
  $region49: #{resblock_pallas.1} parent=0
    _
  %s7 = ssub.s32 1, %s5
  %s8 = scalar_select 0, %s7, %s5
  $region1: #{resblock_pallas.1} parent=0
    #allocation2 [shape = 'u8[8192]{0}', space=vmem, size = 0x2000, scoped, tag = 'output window, operand 0']
    #allocation3 [shape = 's32[2]{0}', space=sflag, size = 0x8, scoped, tag = 'scoped memory for resblock_pallas.1']
    %9 = vsyncpa [#allocation3], 0
    %s10 = scalar_lea.sflag [#allocation3], 1
    %11 = vsyncpa %s10, 0
    loop: start=0, step=1, limit=4
    $region2: #{resblock_pallas.1} parent=1 // loop_pre_header
      _
    $region3: #{resblock_pallas.1} parent=1 // loop_header
      %s13 = sphi 0, %s17
      %p14 = scmp.ge.s32.totalorder %s13, 4
      %s20 = sphi 0, %s32
      %s21 = sphi 0, %s28
      %s22 = sphi 0, %s20
      %s23 = sphi 0, %s21
      %s24 = sphi 0, %s22
      %s25 = sphi 0, %s23
      %s37 = sphi 0, %s39
      %s40 = sphi 0, %s37
      %s41 = sphi 0, %s40
      %s57 = sphi 0, %s41
      %s65 = sphi 0, %s67
      %s68 = sphi 0, %s65
      %s69 = sphi 0, %s68
      %s85 = sphi 0, %s69
      %s89 = sphi 0, %s89
      %s91 = sphi 0, %s89
      %s92 = sphi 0, %s91
      %s106 = sphi 0, %s92
      %s110 = sphi 0, %s110
      %s112 = sphi 0, %s110
      %s113 = sphi 0, %s112
      %s127 = sphi 0, %s113
      %s135 = sphi 0, %s137
      %s138 = sphi 0, %s135
      %s139 = sphi 0, %s138
      %s155 = sphi 0, %s139
    $region4: #{resblock_pallas.1} parent=1 // loop_header_branch
      %16 = sbr.rel (%p14) target = $region8
    $region5: #{resblock_pallas.1} parent=1 // loop_body
      %s18 = ssub.s32 %s13, 1
      %s19 = ssub.s32 %s13, 2
      %s26 = sadd.s32 1, %s21
      %p27 = scmp.ge.s32.totalorder %s26, 1
      %s28 = scalar_select %p27, 0, %s26
      %s29 = sadd.s32 1, %s20
      %s30 = scalar_select %p27, %s29, %s20
      %p31 = scmp.ge.s32.totalorder %s30, 2
      %s32 = scalar_select %p31, 0, %s30
      %s33 = ssub.s32 %s20, %s32
      %s34 = ssub.s32 %s21, %s28
      %s35 = sor.u32 %s33, %s34
      %p36 = scmp.eq.s32.totalorder %s35, 0
      %s38 = sadd.s32 %s37, 1
      %s39 = scalar_select %p36, %s37, %s38
      %p42 = pneg %p36
      %p43 = scmp.eq.s32.totalorder %s13, 1
      %p44 = por %p42, %p43
      %p45 = scmp.ne.s32.totalorder %s37, %s40
      %p46 = scmp.eq.s32.totalorder %s13, 0
      %p47 = por %p45, %p46
      %p48 = scmp.ne.s32.totalorder %s37, %s40
      %p49 = scmp.eq.s32.totalorder %s18, 1
      %p50 = por %p48, %p49
      %p51 = scmp.ne.s32.totalorder %s40, %s41
      %p52 = scmp.eq.s32.totalorder %s18, 0
      %p53 = por %p51, %p52
      %p54 = scmp.ne.s32.totalorder %s40, %s41
      %p55 = scmp.eq.s32.totalorder %s19, 1
      %p56 = por %p54, %p55
      %p58 = scmp.ne.s32.totalorder %s41, %s57
      %p59 = scmp.eq.s32.totalorder %s19, 0
      %p60 = por %p58, %p59
      %s61 = ssub.s32 %s20, %s32
      %s62 = ssub.s32 %s21, %s28
      %s63 = sor.u32 %s61, %s62
      %p64 = scmp.eq.s32.totalorder %s63, 0
      %s66 = sadd.s32 %s65, 1
      %s67 = scalar_select %p64, %s65, %s66
      %p70 = pneg %p64
      %p71 = scmp.eq.s32.totalorder %s13, 1
      %p72 = por %p70, %p71
      %p73 = scmp.ne.s32.totalorder %s65, %s68
      %p74 = scmp.eq.s32.totalorder %s13, 0
      %p75 = por %p73, %p74
      %p76 = scmp.ne.s32.totalorder %s65, %s68
      %p77 = scmp.eq.s32.totalorder %s18, 1
      %p78 = por %p76, %p77
      %p79 = scmp.ne.s32.totalorder %s68, %s69
      %p80 = scmp.eq.s32.totalorder %s18, 0
      %p81 = por %p79, %p80
      %p82 = scmp.ne.s32.totalorder %s68, %s69
      %p83 = scmp.eq.s32.totalorder %s19, 1
      %p84 = por %p82, %p83
      %p86 = scmp.ne.s32.totalorder %s69, %s85
      %p87 = scmp.eq.s32.totalorder %s19, 0
      %p88 = por %p86, %p87
      %s90 = sadd.s32 %s89, 1
      %p93 = scmp.eq.s32.totalorder %s13, 1
      %p94 = scmp.ne.s32.totalorder %s89, %s91
      %p95 = scmp.eq.s32.totalorder %s13, 0
      %p96 = por %p94, %p95
      %p97 = scmp.ne.s32.totalorder %s89, %s91
      %p98 = scmp.eq.s32.totalorder %s18, 1
      %p99 = por %p97, %p98
      %p100 = scmp.ne.s32.totalorder %s91, %s92
      %p101 = scmp.eq.s32.totalorder %s18, 0
      %p102 = por %p100, %p101
      %p103 = scmp.ne.s32.totalorder %s91, %s92
      %p104 = scmp.eq.s32.totalorder %s19, 1
      %p105 = por %p103, %p104
      %p107 = scmp.ne.s32.totalorder %s92, %s106
      %p108 = scmp.eq.s32.totalorder %s19, 0
      %p109 = por %p107, %p108
      %s111 = sadd.s32 %s110, 1
      %p114 = scmp.eq.s32.totalorder %s13, 1
      %p115 = scmp.ne.s32.totalorder %s110, %s112
      %p116 = scmp.eq.s32.totalorder %s13, 0
      %p117 = por %p115, %p116
      %p118 = scmp.ne.s32.totalorder %s110, %s112
      %p119 = scmp.eq.s32.totalorder %s18, 1
      %p120 = por %p118, %p119
      %p121 = scmp.ne.s32.totalorder %s112, %s113
      %p122 = scmp.eq.s32.totalorder %s18, 0
      %p123 = por %p121, %p122
      %p124 = scmp.ne.s32.totalorder %s112, %s113
      %p125 = scmp.eq.s32.totalorder %s19, 1
      %p126 = por %p124, %p125
      %p128 = scmp.ne.s32.totalorder %s113, %s127
      %p129 = scmp.eq.s32.totalorder %s19, 0
      %p130 = por %p128, %p129
      %s131 = ssub.s32 %s20, %s32
      %s132 = ssub.s32 %s21, %s28
      %s133 = sor.u32 %s131, %s132
      %p134 = scmp.eq.s32.totalorder %s133, 0
      %s136 = sadd.s32 %s135, 1
      %s137 = scalar_select %p134, %s135, %s136
      %p140 = pneg %p134
      %p141 = scmp.eq.s32.totalorder %s13, 1
      %p142 = por %p140, %p141
      %p143 = scmp.ne.s32.totalorder %s135, %s138
      %p144 = scmp.eq.s32.totalorder %s13, 0
      %p145 = por %p143, %p144
      %p146 = scmp.ne.s32.totalorder %s135, %s138
      %p147 = scmp.eq.s32.totalorder %s18, 1
      %p148 = por %p146, %p147
      %p149 = scmp.ne.s32.totalorder %s138, %s139
      %p150 = scmp.eq.s32.totalorder %s18, 0
      %p151 = por %p149, %p150
      %p152 = scmp.ne.s32.totalorder %s138, %s139
      %p153 = scmp.eq.s32.totalorder %s19, 1
      %p154 = por %p152, %p153
      %p156 = scmp.ne.s32.totalorder %s139, %s155
      %p157 = scmp.eq.s32.totalorder %s19, 0
      %p158 = por %p156, %p157
      %p159 = scmp.le.s32.totalorder 1, %s13
      %p160 = scmp.lt.s32.totalorder %s13, 3
      %p161 = pnand %p159, %p160
      %p162 = pneg %p161
      // Predicated region
      $region9: #{resblock_pallas.1} parent=5 // pred_check
        _
      $region10: #{resblock_pallas.1} parent=5 // pred_check_branch
        %164 = sbr.rel (%p161) target = $region12
      $region11: #{resblock_pallas.1} parent=5 // pred_region
        %s165 = ssub.s32 %s13, 1
        // Predicated region
        $region13: #{resblock_pallas.1} parent=11 // pred_check
          %p166 = pneg %p102
        $region14: #{resblock_pallas.1} parent=11 // pred_check_branch
          %168 = sbr.rel (%p166) target = $region16
        $region15: #{resblock_pallas.1} parent=11 // pred_region
          _
        $region16: #{resblock_pallas.1} parent=11 // pred_fallthru
          _
        // Predicated region
        $region17: #{resblock_pallas.1} parent=11 // pred_check
          %p169 = pneg %p123
        $region18: #{resblock_pallas.1} parent=11 // pred_check_branch
          %171 = sbr.rel (%p169) target = $region20
        $region19: #{resblock_pallas.1} parent=11 // pred_region
          _
        $region20: #{resblock_pallas.1} parent=11 // pred_fallthru
          _
      $region12: #{resblock_pallas.1} parent=5 // pred_fallthru
        _
      %p172 = scmp.lt.s32.totalorder %s13, 2
      // Predicated region
      $region21: #{resblock_pallas.1} parent=5 // pred_check
        %p173 = pneg %p172
      $region22: #{resblock_pallas.1} parent=5 // pred_check_branch
        %175 = sbr.rel (%p173) target = $region24
      $region23: #{resblock_pallas.1} parent=5 // pred_region
        // Predicated region
        $region25: #{resblock_pallas.1} parent=23 // pred_check
          %p176 = pneg %p47
        $region26: #{resblock_pallas.1} parent=23 // pred_check_branch
          %178 = sbr.rel (%p176) target = $region28
        $region27: #{resblock_pallas.1} parent=23 // pred_region
          %p179 = scmp.lt.s32.totalorder %s20, 1
          %s180 = scalar_select %p179, %s20, 1
          %p181 = scmp.lt.s32.totalorder %s21, 0
          %s182 = scalar_select %p181, %s21, 0
          %s183 = sadd.s32 %s182, %s180
          %s184 = smul.addr %s183, 8
          %s185 = scalar_lea.vmem %s0, %s184
        $region28: #{resblock_pallas.1} parent=23 // pred_fallthru
          _
        // Predicated region
        $region29: #{resblock_pallas.1} parent=23 // pred_check
          %p186 = pneg %p75
        $region30: #{resblock_pallas.1} parent=23 // pred_check_branch
          %188 = sbr.rel (%p186) target = $region32
        $region31: #{resblock_pallas.1} parent=23 // pred_region
          %p189 = scmp.lt.s32.totalorder %s20, 1
          %s190 = scalar_select %p189, %s20, 1
          %p191 = scmp.lt.s32.totalorder %s21, 0
          %s192 = scalar_select %p191, %s21, 0
          %s193 = sadd.s32 %s192, %s190
          %s194 = smul.addr %s193, 8
          %s195 = scalar_lea.vmem %s1, %s194
        $region32: #{resblock_pallas.1} parent=23 // pred_fallthru
          _
      $region24: #{resblock_pallas.1} parent=5 // pred_fallthru
        _
      %p196 = scmp.le.s32.totalorder 1, %s13
      %p197 = scmp.lt.s32.totalorder %s13, 3
      %p198 = pnand %p196, %p197
      %p199 = pneg %p198
      // Predicated region
      $region33: #{resblock_pallas.1} parent=5 // pred_check
        _
      $region34: #{resblock_pallas.1} parent=5 // pred_check_branch
        %201 = sbr.rel (%p198) target = $region36
      $region35: #{resblock_pallas.1} parent=5 // pred_region
        %s202 = ssub.s32 %s13, 1
        %p203 = scmp.lt.s32.totalorder %s22, 1
        %s204 = scalar_select %p203, %s22, 1
        %p205 = scmp.lt.s32.totalorder %s23, 0
        %s206 = scalar_select %p205, %s23, 0
        %s207 = sadd.s32 %s206, %s204
        %s208 = smul.addr %s207, 8
        %s209 = scalar_lea.vmem %s0, %s208
        %p210 = pneg %p53
        %p211 = pneg %p50
        %p212 = scmp.lt.s32.totalorder %s22, 1
        %s213 = scalar_select %p212, %s22, 1
        %p214 = scmp.lt.s32.totalorder %s23, 0
        %s215 = scalar_select %p214, %s23, 0
        %s216 = sadd.s32 %s215, %s213
        %s217 = smul.addr %s216, 8
        %s218 = scalar_lea.vmem %s1, %s217
        %p219 = pneg %p81
        %p220 = pneg %p78
        %p221 = pneg %p102
        %p222 = pneg %p99
        %p223 = pneg %p123
        %p224 = pneg %p120
        %p225 = pneg %p151
        %p226 = pneg %p148
        %s227 = sand.u32 %s138, 1
        %s228 = scalar_lea.sflag [#allocation3], %s227
        %s229 = sand.u32 %s138, 1
        %s230 = smul.addr %s229, 8
        %s231 = scalar_lea.vmem [#allocation2], %s230
        %p232 = scmp.lt.s32.totalorder %s22, 1
        %s233 = scalar_select %p232, %s22, 1
        %p234 = scmp.lt.s32.totalorder %s23, 0
        %s235 = scalar_select %p234, %s23, 0
        %s236 = sadd.s32 %s235, %s233
        %s237 = smul.addr %s236, 8
        %s238 = scalar_lea.vmem %s0, %s237
        %p239 = scmp.lt.s32.totalorder %s22, 1
        %s240 = scalar_select %p239, %s22, 1
        %p241 = scmp.lt.s32.totalorder %s23, 0
        %s242 = scalar_select %p241, %s23, 0
        %s243 = sadd.s32 %s242, %s240
        %s244 = smul.addr %s243, 8
        %s245 = scalar_lea.vmem %s1, %s244
        %v247 = vld [vmem:[%s238] sm:$0xff]
        %v248 = vld [vmem:[%s245] sm:$0xff]
        %250 = vrot.lane.b32.xlu0 %v247, 9
        %v251 = vpop.permute.xlu0 %250
        %vm253 = vcmask 72704
        %v254 = vsel %vm253, %v248, %v251
        %v255 = vsel %vm253, %v251, %v248
        %s256 = smul.u32 %s23, 128
        %s257 = ssub.s32 %s256, 9
        %v258 = vlaneseq
        %v259 = vand.u32 %v258, 127
        %v260 = vadd.s32 %v259, 128
        %v261 = vstv %s257
        %v262 = vadd.s32 %v261, %v259
        %v263 = vadd.s32 %v261, %v260
        %vm264 = vcmp.ge.s32.totalorder %v262, 0
        %vm265 = vcmp.ge.s32.totalorder %v263, 0
        %vm266 = vcmp.lt.s32.totalorder %v262, 64
        %vm267 = vcmp.lt.s32.totalorder %v263, 64
        %vm268 = vmand %vm264, %vm266
        %vm269 = vmand %vm265, %vm267
        %v270 = vsel %vm268, 1, 0
        %v271 = vsel %vm269, 1, 0
        %v272 = vcvt.s32.f32 %v270
        %v273 = vcvt.s32.f32 %v271
        %v274 = vmul.f32 %v254, 0.1
        %v275 = vmul.f32 %v255, 0.1
        %v276 = vmax.f32 %v254, %v274
        %v277 = vmax.f32 %v255, %v275
        %v278 = vpack.c.bf16 %v277, %v276
        %v280 = vunpack.c.l.b16 %v278
        %v281 = vunpack.c.h.b16 %v278
        %v282 = vpack.c.b16 %v280, %v280
        %v283 = vpack.c.b16 %v281, %v281
        %284 = vrot.lane.b32.xlu0 %v282, 127
        %v285 = vpop.permute.xlu0 %284
        %286 = vrot.lane.b32.xlu0 %v283, 127
        %v287 = vpop.permute.xlu0 %286
        %vm288 = vcmask 1039360
        %v289 = vsel %vm288, %v285, %v287
        %290 = vrot.lane.b32.xlu0 %v282, 126
        %v291 = vpop.permute.xlu0 %290
        %292 = vrot.lane.b32.xlu0 %v283, 126
        %v293 = vpop.permute.xlu0 %292
        %vm294 = vcmask 1031168
        %v295 = vsel %vm294, %v291, %v293
        %vm296 = vcmask 1043456
        %v299 = vsel %vm296, %v282, %v289
        %v303 = vsel %vm296, %v283, %v287
        %v305 = vld [vmem:[%s2] sm:$0xf]
        %v306 = vld [vmem:[%s3] sm:$0xff]
        %308 = vset.pattern.permute.xlu0 0
        %309 = vperm.xlu0 %308, %v306
        %v310 = vpop.permute.xlu0 %309
        %vm312 = vcmask 195584
        %v314 = vsel %vm312, %v305, 0
        %v317 = vsel %vm296, %v295, 0
        %v320 = vsel %vm296, %v293, 0
        %322 = vmatpush.bf16.msra.mxu0 0
        %323 = vmatpush.bf16.msra.mxu0 0
        %324 = vmatpush.bf16.msra.mxu0 0
        %325 = vmatpush.bf16.msra.mxu0 0
        %326 = vmatpush.bf16.msra.mxu0 0
        %327 = vmatpush.bf16.msra.mxu0 0
        %328 = vmatpush.bf16.msra.mxu0 %v317
        %329 = vmatpush.bf16.msra.mxu0 %v299
        %330 = vmatmul.bf16.gmra.mxu0 %v314
        %v331 = vpop.f32.mrf.mxu0
        %v332 = vadd.f32 %v310, %v331
        %v333 = vpop.f32.mrf.mxu0
        %334 = vdwg.mxu0
        %335 = vmatpush.bf16.msra.mxu0 0
        %336 = vmatpush.bf16.msra.mxu0 0
        %337 = vmatpush.bf16.msra.mxu0 0
        %338 = vmatpush.bf16.msra.mxu0 0
        %339 = vmatpush.bf16.msra.mxu0 0
        %340 = vmatpush.bf16.msra.mxu0 0
        %341 = vmatpush.bf16.msra.mxu0 %v320
        %342 = vmatpush.bf16.msra.mxu0 %v303
        %343 = vmatmul.bf16.gmra.mxu0 %v314
        %v344 = vpop.f32.mrf.mxu0
        %v345 = vadd.f32 %v310, %v344
        %v346 = vpop.f32.mrf.mxu0
        %347 = vdwg.mxu0
        %v348 = vmul.f32 %v332, 0.1
        %v349 = vmul.f32 %v345, 0.1
        %v350 = vmax.f32 %v332, %v348
        %v351 = vmax.f32 %v345, %v349
        %354 = vrot.lane.b32.xlu0 %v272, 127
        %v355 = vpop.permute.xlu0 %354
        %356 = vrot.lane.b32.xlu0 %v273, 127
        %v357 = vpop.permute.xlu0 %356
        %vm358 = vcmask 1039360
        %v359 = vsel %vm358, %v355, %v357
        %v362 = vmul.f32 %v350, %v359
        %v363 = vmul.f32 %v351, %v357
        %v364 = vpack.c.bf16 %v363, %v362
        %v366 = vunpack.c.l.b16 %v364
        %v367 = vunpack.c.h.b16 %v364
        %v368 = vpack.c.b16 %v366, %v366
        %v369 = vpack.c.b16 %v367, %v367
        %370 = vrot.lane.b32.xlu0 %v368, 125
        %v371 = vpop.permute.xlu0 %370
        %372 = vrot.lane.b32.xlu0 %v369, 125
        %v373 = vpop.permute.xlu0 %372
        %vm374 = vcmask 1022976
        %v375 = vsel %vm374, %v371, %v373
        %376 = vrot.lane.b32.xlu0 %v368, 122
        %v377 = vpop.permute.xlu0 %376
        %378 = vrot.lane.b32.xlu0 %v369, 122
        %v379 = vpop.permute.xlu0 %378
        %vm380 = vcmask 998400
        %v381 = vsel %vm380, %v377, %v379
        %v384 = vsel %vm296, %v368, %v375
        %v388 = vsel %vm296, %v369, %v373
        %s390 = scalar_lea.vmem %s2, 4
        %v391 = vld [vmem:[%s390] sm:$0xf]
        %s392 = scalar_lea.vmem %s3, 8
        %v393 = vld [vmem:[%s392] sm:$0xff]
        %395 = vset.pattern.permute.xlu0 0
        %396 = vperm.xlu0 %395, %v393
        %v397 = vpop.permute.xlu0 %396
        %v400 = vsel %vm312, %v391, 0
        %v403 = vsel %vm296, %v381, 0
        %v406 = vsel %vm296, %v379, 0
        %408 = vmatpush.bf16.msra.mxu0 0
        %409 = vmatpush.bf16.msra.mxu0 0
        %410 = vmatpush.bf16.msra.mxu0 0
        %411 = vmatpush.bf16.msra.mxu0 0
        %412 = vmatpush.bf16.msra.mxu0 0
        %413 = vmatpush.bf16.msra.mxu0 0
        %414 = vmatpush.bf16.msra.mxu0 %v403
        %415 = vmatpush.bf16.msra.mxu0 %v384
        %416 = vmatmul.bf16.gmra.mxu0 %v400
        %v417 = vpop.f32.mrf.mxu0
        %v418 = vadd.f32 %v397, %v417
        %v419 = vpop.f32.mrf.mxu0
        %420 = vdwg.mxu0
        %421 = vmatpush.bf16.msra.mxu0 0
        %422 = vmatpush.bf16.msra.mxu0 0
        %423 = vmatpush.bf16.msra.mxu0 0
        %424 = vmatpush.bf16.msra.mxu0 0
        %425 = vmatpush.bf16.msra.mxu0 0
        %426 = vmatpush.bf16.msra.mxu0 0
        %427 = vmatpush.bf16.msra.mxu0 %v406
        %428 = vmatpush.bf16.msra.mxu0 %v388
        %429 = vmatmul.bf16.gmra.mxu0 %v400
        %v430 = vpop.f32.mrf.mxu0
        %v431 = vadd.f32 %v397, %v430
        %v432 = vpop.f32.mrf.mxu0
        %433 = vdwg.mxu0
        %436 = vrot.lane.b32.xlu0 %v418, 4
        %v437 = vpop.permute.xlu0 %436
        %438 = vrot.lane.b32.xlu0 %v431, 4
        %v439 = vpop.permute.xlu0 %438
        %vm440 = vcmask 31744
        %v441 = vsel %vm440, %v437, %v439
        %v444 = vadd.f32 %v254, %v437
        %v445 = vadd.f32 %v255, %v441
        %v446 = vmul.f32 %v444, 0.1
        %v447 = vmul.f32 %v445, 0.1
        %v448 = vmax.f32 %v444, %v446
        %v449 = vmax.f32 %v445, %v447
        %v450 = vmul.f32 %v448, %v272
        %v451 = vmul.f32 %v449, %v273
        %v452 = vpack.c.bf16 %v451, %v450
        %v454 = vunpack.c.l.b16 %v452
        %v455 = vunpack.c.h.b16 %v452
        %v456 = vpack.c.b16 %v454, %v454
        %v457 = vpack.c.b16 %v455, %v455
        %458 = vrot.lane.b32.xlu0 %v456, 123
        %v459 = vpop.permute.xlu0 %458
        %460 = vrot.lane.b32.xlu0 %v457, 123
        %v461 = vpop.permute.xlu0 %460
        %vm462 = vcmask 1006592
        %v463 = vsel %vm462, %v459, %v461
        %464 = vrot.lane.b32.xlu0 %v456, 118
        %v465 = vpop.permute.xlu0 %464
        %466 = vrot.lane.b32.xlu0 %v457, 118
        %v467 = vpop.permute.xlu0 %466
        %vm468 = vcmask 965632
        %v469 = vsel %vm468, %v465, %v467
        %v472 = vsel %vm296, %v456, %v463
        %v475 = vsel %vm296, %v457, %v461
        %s476 = scalar_lea.vmem %s2, 8
        %v477 = vld [vmem:[%s476] sm:$0xf]
        %s478 = scalar_lea.vmem %s3, 16
        %v479 = vld [vmem:[%s478] sm:$0xff]
        %481 = vset.pattern.permute.xlu0 0
        %482 = vperm.xlu0 %481, %v479
        %v483 = vpop.permute.xlu0 %482
        %487 = vrot.lane.b32.xlu0 %v472, 124
        %v488 = vpop.permute.xlu0 %487
        %489 = vrot.lane.b32.xlu0 %v475, 124
        %v490 = vpop.permute.xlu0 %489
        %491 = vrot.lane.b32.xlu0 %v469, 124
        %v492 = vpop.permute.xlu0 %491
        %493 = vrot.lane.b32.xlu0 %v467, 124
        %v494 = vpop.permute.xlu0 %493
        %vm495 = vcmask 1014784
        %v496 = vsel %vm495, %v488, %v490
        %v497 = vsel %vm495, %v492, %v494
        %v500 = vsel %vm312, %v477, 0
        %v503 = vsel %vm296, %v497, 0
        %505 = vmatpush.bf16.msra.mxu0 0
        %506 = vmatpush.bf16.msra.mxu0 0
        %507 = vmatpush.bf16.msra.mxu0 0
        %508 = vmatpush.bf16.msra.mxu0 0
        %509 = vmatpush.bf16.msra.mxu0 0
        %510 = vmatpush.bf16.msra.mxu0 0
        %511 = vmatpush.bf16.msra.mxu0 %v503
        %512 = vmatpush.bf16.msra.mxu0 %v496
        %513 = vmatmul.bf16.gmra.mxu0 %v500
        %v514 = vpop.f32.mrf.mxu0
        %v515 = vadd.f32 %v483, %v514
        %v516 = vpop.f32.mrf.mxu0
        %517 = vdwg.mxu0
        %519 = vrot.lane.b32.xlu0 %v515, 9
        %v520 = vpop.permute.xlu0 %519
        %v522 = vadd.f32 %v444, %v520
        %v523 = vadd.f32 %v445, %v520
        %526 = vrot.lane.b32.xlu0 %v522, 119
        %v527 = vpop.permute.xlu0 %526
        %528 = vrot.lane.b32.xlu0 %v523, 119
        %v529 = vpop.permute.xlu0 %528
        %vm530 = vcmask 973824
        %v531 = vsel %vm530, %v527, %v529
        %533 = vst [vmem:[%s231] sm:$0xff] %v531
        %s534 = sand.u32 %s138, 1
        %s535 = scalar_lea.sflag [#allocation3], %s534
        %s536 = sand.u32 %s138, 1
        %s537 = smul.addr %s536, 8
        %s538 = scalar_lea.vmem [#allocation2], %s537
        // Predicated region
        $region37: #{resblock_pallas.1} parent=35 // pred_check
          %p539 = pneg %p148
        $region38: #{resblock_pallas.1} parent=35 // pred_check_branch
          %541 = sbr.rel (%p539) target = $region40
        $region39: #{resblock_pallas.1} parent=35 // pred_region
          %543 = vsyncadd %s535, 0
          %s544 = sadd.s32 %s23, %s22
          %s545 = smul.addr %s544, 8
          %s546 = scalar_lea.hbm %s4, %s545
          %s548 = sshll.u32 %s538, 4
          %s549 = int_to_ptr.vmem [resolvable:$true] %s548
          %s550 = sshll.u32 %s546, 4
          %s551 = int_to_ptr.hbm [resolvable:$true] %s550
          %553 = dma.vmem_to_hbm [thread:$0]  %s549, 128, %s551, %s535
        $region40: #{resblock_pallas.1} parent=35 // pred_fallthru
          _
      $region36: #{resblock_pallas.1} parent=5 // pred_fallthru
        _
      %p554 = scmp.le.s32.totalorder 2, %s13
      // Predicated region
      $region41: #{resblock_pallas.1} parent=5 // pred_check
        %p555 = pneg %p554
      $region42: #{resblock_pallas.1} parent=5 // pred_check_branch
        %557 = sbr.rel (%p555) target = $region44
      $region43: #{resblock_pallas.1} parent=5 // pred_region
        %s558 = ssub.s32 %s13, 2
        // Predicated region
        $region45: #{resblock_pallas.1} parent=43 // pred_check
          %p559 = pneg %p154
        $region46: #{resblock_pallas.1} parent=43 // pred_check_branch
          %561 = sbr.rel (%p559) target = $region48
        $region47: #{resblock_pallas.1} parent=43 // pred_region
          %s562 = sand.u32 %s139, 1
          %s563 = scalar_lea.sflag [#allocation3], %s562
          %s564 = sand.u32 %s139, 1
          %s565 = smul.addr %s564, 8
          %s566 = scalar_lea.vmem [#allocation2], %s565
          %568 = dma.done %s563, 128
        $region48: #{resblock_pallas.1} parent=43 // pred_fallthru
          _
      $region44: #{resblock_pallas.1} parent=5 // pred_fallthru
        _
    $region6: #{resblock_pallas.1} parent=1 // loop_footer
      %s17 = sadd.s32 1, %s13
    $region7: #{resblock_pallas.1} parent=1 // loop_footer_branch
      %12 = sbr.rel target = $region3
    $region8: #{resblock_pallas.1} parent=1 // loop_exit
      _
    %569 = vsyncpa [#allocation3], 1
    %s570 = scalar_lea.sflag [#allocation3], 1
    %571 = vsyncpa %s570, 1

</llo_original>
